<compile_context>
chip_gen: v7x
topology: tpu7x:2x2x1
jax: 0.10.0
libtpu: 0.0.40
codegen_flags: <defaults>
</compile_context>

<pallas_src>
import math

import jax
import jax.numpy as jnp
from jax.experimental import pallas as pl
from jax.experimental.pallas import tpu as pltpu

_LANES = 128


def _cdiv(a, b):
    return -(-a // b)


def _round_up(a, m):
    return _cdiv(a, m) * m


def _is_multi_tc_chip():
    """True on chips with >1 TensorCore per chip (v7x); False otherwise."""
    try:
        kind = jax.devices()[0].device_kind.lower()
    except Exception:
        return False
    return "v7" in kind


def _build_kernel(rt, lanes, rows, tiles_per_chunk, gen_masked_path):
    full_blocks = rows // rt  # blocks whose rows are all in-bounds

    def kernel(fake_ref, real_ref, out_ref):
        p = pl.program_id(0)
        i = pl.program_id(1)

        # Zero the resident per-chunk accumulator at the start of its pass.
        @pl.when(i == 0)
        def _():
            out_ref[...] = jnp.zeros_like(out_ref)

        f = fake_ref[...].astype(jnp.float32)
        r = real_ref[...].astype(jnp.float32)

        def accumulate(a):
            # Fold groups of 8 rows with plain VPU adds (stays within (8,128)
            # tiles); the expensive cross-lane reduce happens once, outside.
            out_ref[...] += a.reshape(rt // 8, 8, lanes).sum(axis=0)[None]

        if not gen_masked_path:
            accumulate(jnp.abs(jnp.log(r / f)))
        else:
            g = p * tiles_per_chunk + i  # logical (unclamped) block index

            @pl.when(g < full_blocks)
            def _():  # fast path: every row of this block is valid
                accumulate(jnp.abs(jnp.log(r / f)))

            @pl.when(g >= full_blocks)
            def _():  # tail / redundant block: mask the INPUTS before the log
                row_ids = jax.lax.broadcasted_iota(jnp.int32, (rt, lanes), 0)
                valid = (g * rt + row_ids) < rows
                rm = jnp.where(valid, r, 1.0)
                fm = jnp.where(valid, f, 1.0)
                accumulate(jnp.abs(jnp.log(rm / fm)))

    return kernel


def l1_log(fake, real, *, num_chunks=None, lanes=_LANES):
    """Pallas implementation of L1_log.forward for same-shape inputs.

    loss = mean(|log(real) - log(fake)|)
    """
    assert fake.shape == real.shape, "interpolate branch not supported"
    # TODO(synk): bilinear F.interpolate (align_corners=True) path for
    # mismatched fake/real shapes is not implemented in the kernel.
    assert lanes % 128 == 0

    n_elems = math.prod(fake.shape)
    itemsize = min(jnp.dtype(fake.dtype).itemsize, jnp.dtype(real.dtype).itemsize)
    row_multiple = 8 * max(1, 4 // itemsize)  # 8 f32 / 16 bf16 / 32 int8-fp8

    is_v7 = _is_multi_tc_chip()
    if num_chunks is None:
        num_chunks = 2 if is_v7 else 1  # one chunk per TensorCore
    # ~2 MiB/input blocks on v5e/v6e; ~4 MiB/input on v7x (more VMEM headroom).
    max_row_tile = 8192 if is_v7 else 4096

    rows = _cdiv(n_elems, lanes)
    k = num_chunks if rows >= num_chunks * row_multiple else 1

    rt = min(max_row_tile, _round_up(_cdiv(rows, k), row_multiple))
    n_blocks = _cdiv(rows, rt)
    tiles_per_chunk = _cdiv(n_blocks, k)
    total_blocks = k * tiles_per_chunk

    def prep(x):
        flat = x.reshape(-1)
        rem = n_elems % lanes
        if rem:
            # Only a <=(lanes-1)-element pad to enable the (rows, lanes) view;
            # padded with 1.0 so it contributes |log(1/1)| == 0.
            flat = jnp.pad(flat, (0, lanes - rem), constant_values=1.0)
        return flat.reshape(rows, lanes)

    fake2d = prep(fake)
    real2d = prep(real)

    # Masked path is only generated if some grid step can actually see
    # out-of-range rows (partial last block or redundant clamped block).
    gen_masked_path = (rows % rt != 0) or (total_blocks != n_blocks)

    if total_blocks != n_blocks:
        # Clamp redundant trailing blocks onto the last real block; the kernel
        # masks their contribution to zero via the logical block index.
        def in_map(p, i):
            return (jnp.minimum(p * tiles_per_chunk + i, n_blocks - 1), 0)
    else:
        def in_map(p, i):
            return (p * tiles_per_chunk + i, 0)

    spec_kwargs = {}
    if is_v7 and tiles_per_chunk >= 3 and hasattr(pl, "Buffered"):
        # Use v7x's VMEM headroom for deeper input pipelining.
        spec_kwargs = dict(pipeline_mode=pl.Buffered(3))
    try:
        in_specs = [pl.BlockSpec((rt, lanes), in_map, **spec_kwargs)
                    for _ in range(2)]
    except TypeError:  # older jax without pipeline_mode kwarg
        in_specs = [pl.BlockSpec((rt, lanes), in_map) for _ in range(2)]

    out_bytes = k * 8 * lanes * 4
    cost = pl.CostEstimate(
        flops=5 * n_elems,
        transcendentals=2 * n_elems,  # one log + one reciprocal per element
        bytes_accessed=n_elems * (jnp.dtype(fake.dtype).itemsize
                                  + jnp.dtype(real.dtype).itemsize) + out_bytes,
    )

    partials = pl.pallas_call(
        _build_kernel(rt, lanes, rows, tiles_per_chunk, gen_masked_path),
        out_shape=jax.ShapeDtypeStruct((k, 8, lanes), jnp.float32),
        grid_spec=pltpu.PrefetchScalarGridSpec(
            num_scalar_prefetch=0,
            grid=(k, tiles_per_chunk),
            in_specs=in_specs,
            out_specs=pl.BlockSpec((1, 8, lanes), lambda p, i: (p, 0, 0)),
        ),
        compiler_params=pltpu.CompilerParams(
            dimension_semantics=("parallel", "arbitrary"),
        ),
        cost_estimate=cost,
    )(fake2d, real2d)

    # Single cross-lane/sublane reduce + mean (true element count).
    return jnp.sum(partials) / n_elems


def l1_log_ref(fake, real):
    d = jnp.log(real.astype(jnp.float32)) - jnp.log(fake.astype(jnp.float32))
    return jnp.mean(jnp.abs(d))


if __name__ == "__main__":
    key = jax.random.PRNGKey(0)
    kf, kr = jax.random.split(key)
    shape = (2, 4, 16, 16)  # NCHW
    # Depth-like maps: strictly positive so log() is well-defined.
    fake = jax.random.uniform(kf, shape, jnp.float32, minval=0.1, maxval=2.0)
    real = jax.random.uniform(kr, shape, jnp.float32, minval=0.1, maxval=2.0)

    loss = l1_log(fake, real)
    jax.block_until_ready(loss)

    ref = l1_log_ref(fake, real)
    assert jnp.allclose(loss, ref, rtol=1e-5, atol=1e-6), (loss, ref)
    print("KERNEL_OK")
</pallas_src>

<mosaic_0001>
module attributes {stable_mosaic.version = 11 : i64} {
  func.func @kernel(%arg0: i32, %arg1: i32, %arg2: memref<16x128xf32, #tpu.memory_space<vmem>>, %arg3: memref<16x128xf32, #tpu.memory_space<vmem>>, %arg4: memref<1x8x128xf32, #tpu.memory_space<vmem>>) attributes {dimension_semantics = [#tpu.dimension_semantics<parallel>, #tpu.dimension_semantics<arbitrary>], iteration_bounds = array<i64: 1, 1>, scalar_prefetch = 0 : i64, scratch_operands = 0 : i64, tpu.core_type = #tpu.core_type<tc>, window_params = [{transform_indices = @transform_0, window_bounds = array<i64: 16, 128>}, {transform_indices = @transform_1, window_bounds = array<i64: 16, 128>}, {transform_indices = @transform_2, window_bounds = array<i64: 1, 8, 128>}]} {
    %c0_i32 = arith.constant 0 : i32
    %0 = arith.cmpi eq, %arg1, %c0_i32 : i32
    %1 = arith.extui %0 : i1 to i32
    %c0_i32_0 = arith.constant 0 : i32
    %2 = arith.cmpi ne, %1, %c0_i32_0 : i32
    scf.if %2 {
      %cst_10 = arith.constant 0.000000e+00 : f32
      %14 = vector.broadcast %cst_10 : f32 to vector<1x8x128xf32>
      %c0_11 = arith.constant 0 : index
      %c0_12 = arith.constant 0 : index
      %c0_13 = arith.constant 0 : index
      %15 = vector.load %arg4[%c0_11, %c0_12, %c0_13] : memref<1x8x128xf32, #tpu.memory_space<vmem>>, vector<1x8x128xf32>
      tpu.vector_store %arg4[%c0_11, %c0_12, %c0_13], %14 {strides = array<i32>} : memref<1x8x128xf32, #tpu.memory_space<vmem>>, vector<1x8x128xf32>,
    } else {
    }
    %c0 = arith.constant 0 : index
    %c0_1 = arith.constant 0 : index
    %3 = vector.load %arg2[%c0, %c0_1] : memref<16x128xf32, #tpu.memory_space<vmem>>, vector<16x128xf32>
    %c0_2 = arith.constant 0 : index
    %c0_3 = arith.constant 0 : index
    %4 = vector.load %arg3[%c0_2, %c0_3] : memref<16x128xf32, #tpu.memory_space<vmem>>, vector<16x128xf32>
    %5 = arith.divf %4, %3 : vector<16x128xf32>
    %6 = math.log %5 : vector<16x128xf32>
    %7 = math.absf %6 : vector<16x128xf32>
    %c0_4 = arith.constant 0 : index
    %c0_5 = arith.constant 0 : index
    %c0_6 = arith.constant 0 : index
    %8 = vector.load %arg4[%c0_4, %c0_5, %c0_6] : memref<1x8x128xf32, #tpu.memory_space<vmem>>, vector<1x8x128xf32>
    %9 = vector.shape_cast %7 : vector<16x128xf32> to vector<2x8x128xf32>
    %cst = arith.constant dense<0.000000e+00> : vector<8x128xf32>
    %10 = vector.multi_reduction <add>, %9, %cst [0] : vector<2x8x128xf32> to vector<8x128xf32>
    %11 = vector.shape_cast %10 : vector<8x128xf32> to vector<1x8x128xf32>
    %12 = arith.addf %8, %11 : vector<1x8x128xf32>
    %c0_7 = arith.constant 0 : index
    %c0_8 = arith.constant 0 : index
    %c0_9 = arith.constant 0 : index
    %13 = vector.load %arg4[%c0_7, %c0_8, %c0_9] : memref<1x8x128xf32, #tpu.memory_space<vmem>>, vector<1x8x128xf32>
    tpu.vector_store %arg4[%c0_7, %c0_8, %c0_9], %12 {strides = array<i32>} : memref<1x8x128xf32, #tpu.memory_space<vmem>>, vector<1x8x128xf32>,
    return
  }
  func.func @transform_0(%arg0: i32, %arg1: i32) -> (i32, i32) {
    %c1_i32 = arith.constant 1 : i32
    %0 = arith.muli %arg0, %c1_i32 : i32
    %1 = arith.addi %0, %arg1 : i32
    %c0_i32 = arith.constant 0 : i32
    %c0_i32_0 = arith.constant 0 : i32
    return %1, %c0_i32 : i32, i32
  }
  func.func @transform_1(%arg0: i32, %arg1: i32) -> (i32, i32) {
    %c1_i32 = arith.constant 1 : i32
    %0 = arith.muli %arg0, %c1_i32 : i32
    %1 = arith.addi %0, %arg1 : i32
    %c0_i32 = arith.constant 0 : i32
    %c0_i32_0 = arith.constant 0 : i32
    return %1, %c0_i32 : i32, i32
  }
  func.func @transform_2(%arg0: i32, %arg1: i32) -> (i32, i32, i32) {
    %c0_i32 = arith.constant 0 : i32
    %c0_i32_0 = arith.constant 0 : i32
    %c0_i32_1 = arith.constant 0 : i32
    return %arg0, %c0_i32, %c0_i32_0 : i32, i32, i32
  }
}

</mosaic_0001>

<llo_original>
// kernel: tpu_custom_call.1
$region0: #{tpu_custom_call.1}
  #allocation0 [shape = 'u32[]', space=smem, size = 0x4, offset = 0x4, fixed_abs, tag = 'smem constant byte address 0x4 - core index']
  #allocation1 [shape = 'u32[144,128]{1,0:T(1,128)}', space=vmem, size = 0x12000, scoped, tag = 'internal scratch']
  %s0 = inlined_call_operand.hbm [shape: f32[16,128], index: 0, kind: input, shape index: {}]
  %s1 = inlined_call_operand.hbm [shape: f32[16,128], index: 1, kind: input, shape index: {}]
  %s2 = inlined_call_operand.hbm [shape: f32[1,8,128], index: 2, kind: output, shape index: {}]
  %s3 = sld [smem:[#allocation0]]
  $region30: #{tpu_custom_call.1} parent=0
    _
  %s5 = ssub.s32 1, %s3
  %s6 = scalar_select 0, %s5, %s3
  $region1: #{tpu_custom_call.1} parent=0
    #allocation2 [shape = 'u8[8192]{0}', space=vmem, size = 0x2000, scoped, tag = 'input window, operand 0, single buffered']
    #allocation3 [shape = 's32[1]{0}', space=sflag, size = 0x4, scoped, tag = 'scoped memory for tpu_custom_call.1']
    #allocation4 [shape = 's32[1]{0}', space=sflag, size = 0x4, scoped, tag = 'scoped memory for tpu_custom_call.1']
    #allocation5 [shape = 'u8[8192]{0}', space=vmem, size = 0x2000, scoped, tag = 'input window, operand 1, single buffered']
    #allocation6 [shape = 's32[1]{0}', space=sflag, size = 0x4, scoped, tag = 'scoped memory for tpu_custom_call.1']
    #allocation7 [shape = 'u8[4096]{0}', space=vmem, size = 0x1000, scoped, tag = 'output window, operand 0, single buffered']
    %7 = vsyncpa [#allocation3], 0
    %8 = vsyncpa [#allocation6], 0
    %9 = vsyncpa [#allocation4], 0
    // Predicated region
    $region2: #{tpu_custom_call.1} parent=1 // pred_check
      _
    $region3: #{tpu_custom_call.1} parent=1 // pred_check_branch
      %11 = sbr.rel (0) target = $region5
    $region4: #{tpu_custom_call.1} parent=1 // pred_region
      %s12 = sadd.s32 0, 0
      %s13 = smul.u32 2, %s12
      %s15 = ssub.s32 256, 256
      %16 = vsyncadd [#allocation3], %s15
      %s17 = smul.addr %s13, 128
      %s18 = scalar_lea.hbm %s0, %s17
      %s19 = sshll.u32 [#allocation2], 4
      %s20 = int_to_ptr.vmem [resolvable:$true] %s19
      %25 = dma.hbm_to_vmem [thread:$0]  %s18, 256, %s20, [#allocation3], 128, 128, 8
    $region5: #{tpu_custom_call.1} parent=1 // pred_fallthru
      _
    // Predicated region
    $region6: #{tpu_custom_call.1} parent=1 // pred_check
      _
    $region7: #{tpu_custom_call.1} parent=1 // pred_check_branch
      %27 = sbr.rel (0) target = $region9
    $region8: #{tpu_custom_call.1} parent=1 // pred_region
      %s28 = sadd.s32 0, 0
      %s29 = smul.u32 2, %s28
      %s31 = ssub.s32 256, 256
      %32 = vsyncadd [#allocation6], %s31
      %s33 = smul.addr %s29, 128
      %s34 = scalar_lea.hbm %s1, %s33
      %s35 = sshll.u32 [#allocation5], 4
      %s36 = int_to_ptr.vmem [resolvable:$true] %s35
      %41 = dma.hbm_to_vmem [thread:$0]  %s34, 256, %s36, [#allocation6], 128, 128, 8
    $region9: #{tpu_custom_call.1} parent=1 // pred_fallthru
      _
    // Predicated region
    $region10: #{tpu_custom_call.1} parent=1 // pred_check
      _
    $region11: #{tpu_custom_call.1} parent=1 // pred_check_branch
      %43 = sbr.rel (0) target = $region13
    $region12: #{tpu_custom_call.1} parent=1 // pred_region
      %44 = dma.done [#allocation3], 256
    $region13: #{tpu_custom_call.1} parent=1 // pred_fallthru
      _
    // Predicated region
    $region14: #{tpu_custom_call.1} parent=1 // pred_check
      _
    $region15: #{tpu_custom_call.1} parent=1 // pred_check_branch
      %46 = sbr.rel (0) target = $region17
    $region16: #{tpu_custom_call.1} parent=1 // pred_region
      %47 = dma.done [#allocation6], 256
    $region17: #{tpu_custom_call.1} parent=1 // pred_fallthru
      _
    %s48 = sadd.s32 0, 0
    %s49 = smul.u32 2, %s48
    %s50 = sadd.s32 0, 0
    %s51 = smul.u32 2, %s50
    %p52 = scmp.eq.s32.totalorder 0, 0
    // Predicated region
    $region18: #{tpu_custom_call.1} parent=1 // pred_check
      %p53 = pneg %p52
    $region19: #{tpu_custom_call.1} parent=1 // pred_check_branch
      %55 = sbr.rel (%p53) target = $region21
    $region20: #{tpu_custom_call.1} parent=1 // pred_region
      %56 = vst [vmem:[#allocation7] sm:$0xff] 0.0
    $region21: #{tpu_custom_call.1} parent=1 // pred_fallthru
      _
    %v57 = vld [vmem:[#allocation2] sm:$0xff]
    %v58 = vld [vmem:[#allocation2 + $0x8] sm:$0xff]
    %v59 = vld [vmem:[#allocation5] sm:$0xff]
    %v60 = vld [vmem:[#allocation5 + $0x8] sm:$0xff]
    %v61 = vrcp.pop %v57
    %v62 = vmul.f32 %v59, %v61
    %v63 = vrcp.pop %v58
    %v64 = vmul.f32 %v60, %v63
    %v65 = vlog2.pop %v62
    %v66 = vmul.f32 %v65, 0.6931472
    %v67 = vlog2.pop %v64
    %v68 = vmul.f32 %v67, 0.6931472
    %v69 = vand.u32 2147483647, %v66
    %v70 = vand.u32 2147483647, %v68
    %v71 = vld [vmem:[#allocation7] sm:$0xff]
    %v72 = vadd.f32 %v69, %v70
    %v73 = vadd.f32 %v71, %v72
    %74 = vst [vmem:[#allocation7] sm:$0xff] %v73
    // Predicated region
    $region22: #{tpu_custom_call.1} parent=1 // pred_check
      _
    $region23: #{tpu_custom_call.1} parent=1 // pred_check_branch
      %76 = sbr.rel (0) target = $region25
    $region24: #{tpu_custom_call.1} parent=1 // pred_region
      %s78 = ssub.s32 128, 128
      %79 = vsyncadd [#allocation4], %s78
      %s81 = sshll.u32 [#allocation7], 4
      %s82 = int_to_ptr.vmem [resolvable:$true] %s81
      %84 = dma.vmem_to_hbm [thread:$0]  %s82, 128, %s2, [#allocation4]
    $region25: #{tpu_custom_call.1} parent=1 // pred_fallthru
      _
    // Predicated region
    $region26: #{tpu_custom_call.1} parent=1 // pred_check
      _
    $region27: #{tpu_custom_call.1} parent=1 // pred_check_branch
      %86 = sbr.rel (0) target = $region29
    $region28: #{tpu_custom_call.1} parent=1 // pred_region
      %87 = dma.done [#allocation4], 128
    $region29: #{tpu_custom_call.1} parent=1 // pred_fallthru
      _
    %88 = vsyncpa [#allocation3], 1
    %89 = vsyncpa [#allocation6], 1
    %90 = vsyncpa [#allocation4], 1

</llo_original>
